<compile_context>
chip_gen: v6e
topology: v6e:2x2x1
jax: 0.10.0
libtpu: 0.0.40
codegen_flags: <defaults>
</compile_context>

<pallas_src>
import functools

import numpy as np
import jax
import jax.numpy as jnp
from jax import lax
from jax.experimental import pallas as pl
from jax.experimental.pallas import tpu as pltpu

_SUBLANE = {4: 8, 2: 16, 1: 32}   # dtype itemsize -> native sublane multiple


def _round_up(n, m):
    return (n + m - 1) // m * m


def _emix_kernel(power_ref, x_ref, noise_ref, out_ref, *, seg):
    """power_ref: SMEM (1,) f32; x/noise/out: (TM, Dp) VMEM tiles; seg = logical rows packed per row."""
    x = x_ref[...].astype(jnp.float32)
    noise = noise_ref[...].astype(jnp.float32)
    if seg == 1:
        mean = jnp.mean(noise, axis=-1, keepdims=True)       # per-row mean (XLU reduce)
        centered = noise - mean
    else:
        # `seg` logical rows of width d are packed into each physical 128-lane row.
        # Segmented mean via a (Dp, Dp) block-averaging matmul: the MXU is idle in this
        # memory-bound kernel and this avoids narrow (d < 128) intermediates / relayouts.
        dp = noise.shape[-1]
        d = dp // seg
        li = lax.broadcasted_iota(jnp.int32, (dp, dp), 0) // d
        lj = lax.broadcasted_iota(jnp.int32, (dp, dp), 1) // d
        avg_mat = jnp.where(li == lj, jnp.float32(1.0 / d), jnp.float32(0.0))
        mean = jnp.dot(noise, avg_mat, preferred_element_type=jnp.float32,
                       precision=lax.Precision.HIGHEST)
        centered = noise - mean
    out_ref[...] = (x + power_ref[0] * centered).astype(out_ref.dtype)


def emix_noiser_forward(x, key, power=0.1, training=True):
    """Functional equivalent of EMixNoiser.forward (inplace=False, dim=-1, sample_t=None)."""
    if not training:
        return x

    orig_shape = x.shape
    orig_dtype = x.dtype
    D = int(orig_shape[-1])
    N = int(np.prod(orig_shape[:-1])) if len(orig_shape) > 1 else 1
    itemsize = jnp.dtype(orig_dtype).itemsize

    x2 = x.reshape(N, D)

    # torch.randperm + index_select done in the wrapper.  allow_input_fusion below lets XLA
    # fuse this gather into the kernel's noise-operand read (no HBM materialization); if it
    # does not fuse, HBM traffic matches the previous revision.
    # TODO(synk): for very large rows (D*itemsize >= ~2 KiB) an in-kernel per-row DMA gather
    # via scalar-prefetched `perm` would guarantee the 3x-N*D HBM-traffic minimum.
    perm = jax.random.permutation(key, N)
    noise = jnp.take(x2, perm, axis=0)

    # Lane-dense packing for narrow feature dims (free row-major reshape).
    seg = 1
    if D < 128 and 128 % D == 0 and N % (128 // D) == 0:
        seg = 128 // D
    Np, Dp = N // seg, D * seg
    if seg > 1:
        x2 = x2.reshape(Np, Dp)
        noise = noise.reshape(Np, Dp)

    # Generation-aware tile budget / scoped-VMEM limit.
    try:
        vmem_cap = int(pltpu.get_tpu_info().vmem_capacity_bytes)
    except Exception:                     # conservative default, safe on every generation
        vmem_cap = 64 << 20
    if vmem_cap >= (100 << 20):           # v5e / v6e class: 128 MiB VMEM
        tile_budget, vmem_limit = 6 << 20, 64 << 20
    else:                                 # v7x class: 64 MiB VMEM per TensorCore
        tile_budget, vmem_limit = 4 << 20, 40 << 20

    # Row tile: dtype-native sublane multiple, as tall as the byte budget allows, but capped
    # so large inputs still produce >= ~8 grid steps (keeps both v7x TCs / DMA streams busy).
    sub = _SUBLANE.get(itemsize, 8)
    row_bytes = max(Dp * itemsize, 1)
    rows_fit = max(sub, (tile_budget // row_bytes) // sub * sub)
    rows_for_steps = _round_up(int(pl.cdiv(Np, 8)), sub)
    TM = int(max(sub, min(rows_fit, rows_for_steps)))

    # Keep 3 operands x 2 pipeline buffers inside the scoped limit (huge-D corner case).
    vmem_limit = int(max(vmem_limit, 6 * TM * row_bytes + (4 << 20)))
    # TODO(synk): D-blocked two-pass mean for D so large that even an 8-row tile overflows VMEM.

    grid = (int(pl.cdiv(Np, TM)),)        # ragged tail handled by masked writeback

    power_arr = jnp.asarray([power], dtype=jnp.float32)
    cost = pl.CostEstimate(flops=5 * N * D, transcendentals=0,
                           bytes_accessed=3 * N * D * itemsize)

    out2 = pl.pallas_call(
        functools.partial(_emix_kernel, seg=seg),
        out_shape=jax.ShapeDtypeStruct((Np, Dp), orig_dtype),
        grid=grid,
        in_specs=[
            pl.BlockSpec(memory_space=pltpu.MemorySpace.SMEM),   # power scalar
            pl.BlockSpec((TM, Dp), lambda i: (i, 0)),            # x tile
            pl.BlockSpec((TM, Dp), lambda i: (i, 0)),            # shuffled-noise tile
        ],
        out_specs=pl.BlockSpec((TM, Dp), lambda i: (i, 0)),
        compiler_params=pltpu.CompilerParams(
            dimension_semantics=("parallel",),        # rows independent -> both TCs on v7x
            vmem_limit_bytes=vmem_limit,
            allow_input_fusion=[False, False, True],  # let XLA fuse the gather into the read
        ),
        cost_estimate=cost,
    )(power_arr, x2, noise)

    return out2.reshape(orig_shape)


def _reference(x, key, power):
    orig_shape = x.shape
    D = orig_shape[-1]
    N = int(np.prod(orig_shape[:-1]))
    x2 = x.reshape(N, D).astype(jnp.float32)
    perm = jax.random.permutation(key, N)
    noise = x2[perm]
    noise = noise - noise.mean(axis=-1, keepdims=True)
    return (x2 + power * noise).reshape(orig_shape).astype(x.dtype)


if __name__ == "__main__":
    key = jax.random.PRNGKey(0)
    kx1, kp1, kx2, kp2, kx3, kp3, kx4, kp4 = jax.random.split(key, 8)
    power = 0.1

    # 1) f32, D=128, N=16 rows: two full tiles.
    x = jax.random.normal(kx1, (2, 8, 128), dtype=jnp.float32)
    out = jax.block_until_ready(emix_noiser_forward(x, kp1, power=power, training=True))
    np.testing.assert_allclose(np.asarray(out), np.asarray(_reference(x, kp1, power)),
                               rtol=1e-5, atol=1e-5)

    # 2) f32, D=64, N=15: ragged tail block (no padding) + narrow-D fallback (N % 2 != 0).
    y = jax.random.normal(kx2, (3, 5, 64), dtype=jnp.float32)
    out2 = jax.block_until_ready(emix_noiser_forward(y, kp2, power=power, training=True))
    np.testing.assert_allclose(np.asarray(out2), np.asarray(_reference(y, kp2, power)),
                               rtol=1e-5, atol=1e-5)

    # 3) f32, D=64, N=16: lane-dense packing path (2 logical rows per 128-lane row).
    z = jax.random.normal(kx3, (2, 8, 64), dtype=jnp.float32)
    out3 = jax.block_until_ready(emix_noiser_forward(z, kp3, power=power, training=True))
    np.testing.assert_allclose(np.asarray(out3), np.asarray(_reference(z, kp3, power)),
                               rtol=1e-4, atol=1e-4)

    # 4) bf16 input: dtype-native sublane multiple (TM rounded to 16) + in-vreg f32 widen.
    w = jax.random.normal(kx4, (2, 16, 256), dtype=jnp.bfloat16)
    out4 = jax.block_until_ready(emix_noiser_forward(w, kp4, power=power, training=True))
    ref4 = _reference(w, kp4, power)
    np.testing.assert_allclose(np.asarray(out4.astype(jnp.float32)),
                               np.asarray(ref4.astype(jnp.float32)),
                               rtol=2e-2, atol=2e-2)

    # Eval mode passthrough.
    assert emix_noiser_forward(x, kp1, power=power, training=False) is x

    print("KERNEL_OK")
</pallas_src>

<mosaic_0001>
module attributes {stable_mosaic.version = 11 : i64} {
  func.func @_emix_kernel(%arg0: i32, %arg1: memref<1xf32, #tpu.memory_space<smem>>, %arg2: memref<8x128xf32, #tpu.memory_space<vmem>>, %arg3: memref<8x128xf32, #tpu.memory_space<vmem>>, %arg4: memref<8x128xf32, #tpu.memory_space<vmem>>) attributes {dimension_semantics = [#tpu.dimension_semantics<parallel>], iteration_bounds = array<i64: 2>, scalar_prefetch = 0 : i64, scratch_operands = 0 : i64, tpu.core_type = #tpu.core_type<tc>, window_params = [{transform_indices = @transform_0, window_bounds = array<i64: 1>}, {transform_indices = @transform_1, window_bounds = array<i64: 8, 128>}, {transform_indices = @transform_2, window_bounds = array<i64: 8, 128>}, {transform_indices = @transform_3, window_bounds = array<i64: 8, 128>}]} {
    %c0 = arith.constant 0 : index
    %c0_0 = arith.constant 0 : index
    %0 = vector.load %arg2[%c0, %c0_0] : memref<8x128xf32, #tpu.memory_space<vmem>>, vector<8x128xf32>
    %c0_1 = arith.constant 0 : index
    %c0_2 = arith.constant 0 : index
    %1 = vector.load %arg3[%c0_1, %c0_2] : memref<8x128xf32, #tpu.memory_space<vmem>>, vector<8x128xf32>
    %cst = arith.constant dense<0.000000e+00> : vector<8xf32>
    %2 = vector.multi_reduction <add>, %1, %cst [1] : vector<8x128xf32> to vector<8xf32>
    %3 = vector.shape_cast %2 : vector<8xf32> to vector<8x1xf32>
    %cst_3 = arith.constant 1.280000e+02 : f32
    %4 = vector.broadcast %cst_3 : f32 to vector<8x1xf32>
    %5 = arith.divf %3, %4 : vector<8x1xf32>
    %6 = vector.broadcast %5 : vector<8x1xf32> to vector<8x128xf32>
    %7 = arith.subf %1, %6 : vector<8x128xf32>
    %c0_4 = arith.constant 0 : index
    %8 = memref.load %arg1[%c0_4] : memref<1xf32, #tpu.memory_space<smem>>
    %9 = vector.broadcast %8 : f32 to vector<8x128xf32>
    %10 = arith.mulf %9, %7 : vector<8x128xf32>
    %11 = arith.addf %0, %10 : vector<8x128xf32>
    %c0_5 = arith.constant 0 : index
    %c0_6 = arith.constant 0 : index
    %12 = vector.load %arg4[%c0_5, %c0_6] : memref<8x128xf32, #tpu.memory_space<vmem>>, vector<8x128xf32>
    tpu.vector_store %arg4[%c0_5, %c0_6], %11 {strides = array<i32>} : memref<8x128xf32, #tpu.memory_space<vmem>>, vector<8x128xf32>,
    return
  }
  func.func @transform_0(%arg0: i32) -> i32 {
    %c0_i32 = arith.constant 0 : i32
    %c0_i32_0 = arith.constant 0 : i32
    return %c0_i32 : i32
  }
  func.func @transform_1(%arg0: i32) -> (i32, i32) {
    %c0_i32 = arith.constant 0 : i32
    %c0_i32_0 = arith.constant 0 : i32
    return %arg0, %c0_i32 : i32, i32
  }
  func.func @transform_2(%arg0: i32) -> (i32, i32) {
    %c0_i32 = arith.constant 0 : i32
    %c0_i32_0 = arith.constant 0 : i32
    return %arg0, %c0_i32 : i32, i32
  }
  func.func @transform_3(%arg0: i32) -> (i32, i32) {
    %c0_i32 = arith.constant 0 : i32
    %c0_i32_0 = arith.constant 0 : i32
    return %arg0, %c0_i32 : i32, i32
  }
}

</mosaic_0001>

<llo_original>
// kernel: tpu_custom_call.1
$region0: #{tpu_custom_call.1}
  #allocation0 [shape = 'u32[]', space=smem, size = 0x4, offset = 0x4, fixed_abs, tag = 'smem constant byte address 0x4 - core index']
  #allocation1 [shape = 'u32[144,128]{1,0:T(1,128)}', space=vmem, size = 0x12000, scoped, tag = 'internal scratch']
  #allocation2 [shape = 'f32[1]{0:T(128)S(6)}', space=smem, size = 0x200, scoped, tag = 'scoped memory for tpu_custom_call.1']
  %s0 = inlined_call_operand.<no memory space> [shape: f32[1], index: 0, kind: input, shape index: {}]
  %s1 = inlined_call_operand.hbm [shape: f32[16,128], index: 1, kind: input, shape index: {}]
  %s2 = inlined_call_operand.hbm [shape: f32[16,128], index: 2, kind: input, shape index: {}]
  %s3 = inlined_call_operand.hbm [shape: f32[16,128], index: 3, kind: output, shape index: {}]
  %s4 = sld [smem:[#allocation0]]
  $region53: #{tpu_custom_call.1} parent=0
    _
  %s6 = ssub.s32 1, %s4
  %s7 = scalar_select 0, %s6, %s4
  %8 = sst [smem:[#allocation2]] %s0
  $region1: #{tpu_custom_call.1} parent=0
    #allocation3 [shape = 'u8[8192]{0}', space=vmem, size = 0x2000, scoped, tag = 'input window, operand 1']
    #allocation4 [shape = 's32[2]{0}', space=sflag, size = 0x8, scoped, tag = 'scoped memory for tpu_custom_call.1']
    #allocation5 [shape = 's32[2]{0}', space=sflag, size = 0x8, scoped, tag = 'scoped memory for tpu_custom_call.1']
    #allocation6 [shape = 'u8[8192]{0}', space=vmem, size = 0x2000, scoped, tag = 'input window, operand 2']
    #allocation7 [shape = 's32[2]{0}', space=sflag, size = 0x8, scoped, tag = 'scoped memory for tpu_custom_call.1']
    #allocation8 [shape = 'u8[8192]{0}', space=vmem, size = 0x2000, scoped, tag = 'output window, operand 0']
    %9 = vsyncpa [#allocation4], 0
    %s10 = scalar_lea.sflag [#allocation4], 1
    %11 = vsyncpa %s10, 0
    %12 = vsyncpa [#allocation7], 0
    %s13 = scalar_lea.sflag [#allocation7], 1
    %14 = vsyncpa %s13, 0
    %15 = vsyncpa [#allocation5], 0
    %s16 = scalar_lea.sflag [#allocation5], 1
    %17 = vsyncpa %s16, 0
    loop: start=0, step=1, limit=4
    $region2: #{tpu_custom_call.1} parent=1 // loop_pre_header
      _
    $region3: #{tpu_custom_call.1} parent=1 // loop_header
      %s19 = sphi 0, %s23
      %p20 = scmp.ge.s32.totalorder %s19, 4
      %s27 = sphi 0, %s27
      %s29 = sphi 0, %s27
      %s30 = sphi 0, %s29
      %s44 = sphi 0, %s30
      %s50 = sphi 0, %s52
      %s53 = sphi 0, %s50
      %s54 = sphi 0, %s53
      %s70 = sphi 0, %s54
      %s76 = sphi 0, %s78
      %s79 = sphi 0, %s76
      %s80 = sphi 0, %s79
      %s96 = sphi 0, %s80
      %s102 = sphi 0, %s104
      %s105 = sphi 0, %s102
      %s106 = sphi 0, %s105
      %s122 = sphi 0, %s106
    $region4: #{tpu_custom_call.1} parent=1 // loop_header_branch
      %22 = sbr.rel (%p20) target = $region8
    $region5: #{tpu_custom_call.1} parent=1 // loop_body
      %s24 = ssub.s32 %s19, 1
      %s25 = ssub.s32 %s19, 2
      %s26 = sadd.s32 %s19, 1
      %s28 = sadd.s32 %s27, 1
      %p31 = scmp.eq.s32.totalorder %s19, 1
      %p32 = scmp.ne.s32.totalorder %s27, %s29
      %p33 = scmp.eq.s32.totalorder %s19, 0
      %p34 = por %p32, %p33
      %p35 = scmp.ne.s32.totalorder %s27, %s29
      %p36 = scmp.eq.s32.totalorder %s24, 1
      %p37 = por %p35, %p36
      %p38 = scmp.ne.s32.totalorder %s29, %s30
      %p39 = scmp.eq.s32.totalorder %s24, 0
      %p40 = por %p38, %p39
      %p41 = scmp.ne.s32.totalorder %s29, %s30
      %p42 = scmp.eq.s32.totalorder %s25, 1
      %p43 = por %p41, %p42
      %p45 = scmp.ne.s32.totalorder %s30, %s44
      %p46 = scmp.eq.s32.totalorder %s25, 0
      %p47 = por %p45, %p46
      %s48 = ssub.s32 %s19, %s26
      %p49 = scmp.eq.s32.totalorder %s48, 0
      %s51 = sadd.s32 %s50, 1
      %s52 = scalar_select %p49, %s50, %s51
      %p55 = pneg %p49
      %p56 = scmp.eq.s32.totalorder %s19, 1
      %p57 = por %p55, %p56
      %p58 = scmp.ne.s32.totalorder %s50, %s53
      %p59 = scmp.eq.s32.totalorder %s19, 0
      %p60 = por %p58, %p59
      %p61 = scmp.ne.s32.totalorder %s50, %s53
      %p62 = scmp.eq.s32.totalorder %s24, 1
      %p63 = por %p61, %p62
      %p64 = scmp.ne.s32.totalorder %s53, %s54
      %p65 = scmp.eq.s32.totalorder %s24, 0
      %p66 = por %p64, %p65
      %p67 = scmp.ne.s32.totalorder %s53, %s54
      %p68 = scmp.eq.s32.totalorder %s25, 1
      %p69 = por %p67, %p68
      %p71 = scmp.ne.s32.totalorder %s54, %s70
      %p72 = scmp.eq.s32.totalorder %s25, 0
      %p73 = por %p71, %p72
      %s74 = ssub.s32 %s19, %s26
      %p75 = scmp.eq.s32.totalorder %s74, 0
      %s77 = sadd.s32 %s76, 1
      %s78 = scalar_select %p75, %s76, %s77
      %p81 = pneg %p75
      %p82 = scmp.eq.s32.totalorder %s19, 1
      %p83 = por %p81, %p82
      %p84 = scmp.ne.s32.totalorder %s76, %s79
      %p85 = scmp.eq.s32.totalorder %s19, 0
      %p86 = por %p84, %p85
      %p87 = scmp.ne.s32.totalorder %s76, %s79
      %p88 = scmp.eq.s32.totalorder %s24, 1
      %p89 = por %p87, %p88
      %p90 = scmp.ne.s32.totalorder %s79, %s80
      %p91 = scmp.eq.s32.totalorder %s24, 0
      %p92 = por %p90, %p91
      %p93 = scmp.ne.s32.totalorder %s79, %s80
      %p94 = scmp.eq.s32.totalorder %s25, 1
      %p95 = por %p93, %p94
      %p97 = scmp.ne.s32.totalorder %s80, %s96
      %p98 = scmp.eq.s32.totalorder %s25, 0
      %p99 = por %p97, %p98
      %s100 = ssub.s32 %s19, %s26
      %p101 = scmp.eq.s32.totalorder %s100, 0
      %s103 = sadd.s32 %s102, 1
      %s104 = scalar_select %p101, %s102, %s103
      %p107 = pneg %p101
      %p108 = scmp.eq.s32.totalorder %s19, 1
      %p109 = por %p107, %p108
      %p110 = scmp.ne.s32.totalorder %s102, %s105
      %p111 = scmp.eq.s32.totalorder %s19, 0
      %p112 = por %p110, %p111
      %p113 = scmp.ne.s32.totalorder %s102, %s105
      %p114 = scmp.eq.s32.totalorder %s24, 1
      %p115 = por %p113, %p114
      %p116 = scmp.ne.s32.totalorder %s105, %s106
      %p117 = scmp.eq.s32.totalorder %s24, 0
      %p118 = por %p116, %p117
      %p119 = scmp.ne.s32.totalorder %s105, %s106
      %p120 = scmp.eq.s32.totalorder %s25, 1
      %p121 = por %p119, %p120
      %p123 = scmp.ne.s32.totalorder %s106, %s122
      %p124 = scmp.eq.s32.totalorder %s25, 0
      %p125 = por %p123, %p124
      %p126 = scmp.le.s32.totalorder 1, %s19
      %p127 = scmp.lt.s32.totalorder %s19, 3
      %p128 = pnand %p126, %p127
      %p129 = pneg %p128
      // Predicated region
      $region9: #{tpu_custom_call.1} parent=5 // pred_check
        _
      $region10: #{tpu_custom_call.1} parent=5 // pred_check_branch
        %131 = sbr.rel (%p128) target = $region12
      $region11: #{tpu_custom_call.1} parent=5 // pred_region
        %s132 = ssub.s32 %s19, 1
        // Predicated region
        $region13: #{tpu_custom_call.1} parent=11 // pred_check
          %p133 = pneg %p40
        $region14: #{tpu_custom_call.1} parent=11 // pred_check_branch
          %135 = sbr.rel (%p133) target = $region16
        $region15: #{tpu_custom_call.1} parent=11 // pred_region
          _
        $region16: #{tpu_custom_call.1} parent=11 // pred_fallthru
          _
      $region12: #{tpu_custom_call.1} parent=5 // pred_fallthru
        _
      %p136 = scmp.lt.s32.totalorder %s19, 2
      // Predicated region
      $region17: #{tpu_custom_call.1} parent=5 // pred_check
        %p137 = pneg %p136
      $region18: #{tpu_custom_call.1} parent=5 // pred_check_branch
        %139 = sbr.rel (%p137) target = $region20
      $region19: #{tpu_custom_call.1} parent=5 // pred_region
        // Predicated region
        $region21: #{tpu_custom_call.1} parent=19 // pred_check
          %p140 = pneg %p60
        $region22: #{tpu_custom_call.1} parent=19 // pred_check_branch
          %142 = sbr.rel (%p140) target = $region24
        $region23: #{tpu_custom_call.1} parent=19 // pred_region
          %s143 = sand.u32 %s50, 1
          %s144 = scalar_lea.sflag [#allocation4], %s143
          %s145 = sand.u32 %s50, 1
          %s146 = smul.addr %s145, 8
          %s147 = scalar_lea.vmem [#allocation3], %s146
          %s149 = ssub.s32 128, 128
          %150 = vsyncadd %s144, %s149
          %s151 = smul.addr %s19, 128
          %s152 = scalar_lea.hbm %s1, %s151
          %s154 = sshll.u32 %s147, 4
          %s155 = int_to_ptr.vmem [resolvable:$true] %s154
          %157 = dma.hbm_to_vmem [thread:$0]  %s152, 128, %s155, %s144
        $region24: #{tpu_custom_call.1} parent=19 // pred_fallthru
          _
        // Predicated region
        $region25: #{tpu_custom_call.1} parent=19 // pred_check
          %p158 = pneg %p86
        $region26: #{tpu_custom_call.1} parent=19 // pred_check_branch
          %160 = sbr.rel (%p158) target = $region28
        $region27: #{tpu_custom_call.1} parent=19 // pred_region
          %s161 = sand.u32 %s76, 1
          %s162 = scalar_lea.sflag [#allocation7], %s161
          %s163 = sand.u32 %s76, 1
          %s164 = smul.addr %s163, 8
          %s165 = scalar_lea.vmem [#allocation6], %s164
          %s167 = ssub.s32 128, 128
          %168 = vsyncadd %s162, %s167
          %s169 = smul.addr %s19, 128
          %s170 = scalar_lea.hbm %s2, %s169
          %s172 = sshll.u32 %s165, 4
          %s173 = int_to_ptr.vmem [resolvable:$true] %s172
          %175 = dma.hbm_to_vmem [thread:$0]  %s170, 128, %s173, %s162
        $region28: #{tpu_custom_call.1} parent=19 // pred_fallthru
          _
      $region20: #{tpu_custom_call.1} parent=5 // pred_fallthru
        _
      %p176 = scmp.le.s32.totalorder 1, %s19
      %p177 = scmp.lt.s32.totalorder %s19, 3
      %p178 = pnand %p176, %p177
      %p179 = pneg %p178
      // Predicated region
      $region29: #{tpu_custom_call.1} parent=5 // pred_check
        _
      $region30: #{tpu_custom_call.1} parent=5 // pred_check_branch
        %181 = sbr.rel (%p178) target = $region32
      $region31: #{tpu_custom_call.1} parent=5 // pred_region
        %s182 = ssub.s32 %s19, 1
        %s183 = sand.u32 %s53, 1
        %s184 = scalar_lea.sflag [#allocation4], %s183
        %s185 = sand.u32 %s53, 1
        %s186 = smul.addr %s185, 8
        %s187 = scalar_lea.vmem [#allocation3], %s186
        // Predicated region
        $region33: #{tpu_custom_call.1} parent=31 // pred_check
          %p188 = pneg %p66
        $region34: #{tpu_custom_call.1} parent=31 // pred_check_branch
          %190 = sbr.rel (%p188) target = $region36
        $region35: #{tpu_custom_call.1} parent=31 // pred_region
          %191 = dma.done %s184, 128
        $region36: #{tpu_custom_call.1} parent=31 // pred_fallthru
          _
        %s192 = sand.u32 %s79, 1
        %s193 = scalar_lea.sflag [#allocation7], %s192
        %s194 = sand.u32 %s79, 1
        %s195 = smul.addr %s194, 8
        %s196 = scalar_lea.vmem [#allocation6], %s195
        // Predicated region
        $region37: #{tpu_custom_call.1} parent=31 // pred_check
          %p197 = pneg %p92
        $region38: #{tpu_custom_call.1} parent=31 // pred_check_branch
          %199 = sbr.rel (%p197) target = $region40
        $region39: #{tpu_custom_call.1} parent=31 // pred_region
          %200 = dma.done %s193, 128
        $region40: #{tpu_custom_call.1} parent=31 // pred_fallthru
          _
        %p201 = pneg %p40
        %p202 = pneg %p37
        %s203 = sand.u32 %s53, 1
        %s204 = scalar_lea.sflag [#allocation4], %s203
        %s205 = sand.u32 %s53, 1
        %s206 = smul.addr %s205, 8
        %s207 = scalar_lea.vmem [#allocation3], %s206
        %p208 = pneg %p66
        %p209 = pneg %p63
        %s210 = sand.u32 %s79, 1
        %s211 = scalar_lea.sflag [#allocation7], %s210
        %s212 = sand.u32 %s79, 1
        %s213 = smul.addr %s212, 8
        %s214 = scalar_lea.vmem [#allocation6], %s213
        %p215 = pneg %p92
        %p216 = pneg %p89
        %p217 = pneg %p118
        %p218 = pneg %p115
        %s219 = sand.u32 %s105, 1
        %s220 = scalar_lea.sflag [#allocation5], %s219
        %s221 = sand.u32 %s105, 1
        %s222 = smul.addr %s221, 8
        %s223 = scalar_lea.vmem [#allocation8], %s222
        %v224 = vld [vmem:[%s187] sm:$0xff]
        %v225 = vld [vmem:[%s196] sm:$0xff]
        %226 = vadd.xlane.f32.xlu0 %v225
        %v227 = vpop.xlane.xlu0 %226
        %v228 = vrcp.pop 128.0
        %v229 = vmul.f32 %v227, %v228
        %v230 = vsub.f32 %v225, %v229
        %s231 = sld [smem:[#allocation2]]
        %v232 = vstv %s231
        %v233 = vmul.f32 %v232, %v230
        %v234 = vadd.f32 %v224, %v233
        %235 = vst [vmem:[%s223] sm:$0xff] %v234
        %s236 = sand.u32 %s105, 1
        %s237 = scalar_lea.sflag [#allocation5], %s236
        %s238 = sand.u32 %s105, 1
        %s239 = smul.addr %s238, 8
        %s240 = scalar_lea.vmem [#allocation8], %s239
        // Predicated region
        $region41: #{tpu_custom_call.1} parent=31 // pred_check
          %p241 = pneg %p115
        $region42: #{tpu_custom_call.1} parent=31 // pred_check_branch
          %243 = sbr.rel (%p241) target = $region44
        $region43: #{tpu_custom_call.1} parent=31 // pred_region
          %s245 = ssub.s32 128, 128
          %246 = vsyncadd %s237, %s245
          %s247 = smul.addr %s24, 128
          %s248 = scalar_lea.hbm %s3, %s247
          %s250 = sshll.u32 %s240, 4
          %s251 = int_to_ptr.vmem [resolvable:$true] %s250
          %253 = dma.vmem_to_hbm [thread:$0]  %s251, 128, %s248, %s237
        $region44: #{tpu_custom_call.1} parent=31 // pred_fallthru
          _
      $region32: #{tpu_custom_call.1} parent=5 // pred_fallthru
        _
      %p254 = scmp.le.s32.totalorder 2, %s19
      // Predicated region
      $region45: #{tpu_custom_call.1} parent=5 // pred_check
        %p255 = pneg %p254
      $region46: #{tpu_custom_call.1} parent=5 // pred_check_branch
        %257 = sbr.rel (%p255) target = $region48
      $region47: #{tpu_custom_call.1} parent=5 // pred_region
        %s258 = ssub.s32 %s19, 2
        // Predicated region
        $region49: #{tpu_custom_call.1} parent=47 // pred_check
          %p259 = pneg %p121
        $region50: #{tpu_custom_call.1} parent=47 // pred_check_branch
          %261 = sbr.rel (%p259) target = $region52
        $region51: #{tpu_custom_call.1} parent=47 // pred_region
          %s262 = sand.u32 %s106, 1
          %s263 = scalar_lea.sflag [#allocation5], %s262
          %s264 = sand.u32 %s106, 1
          %s265 = smul.addr %s264, 8
          %s266 = scalar_lea.vmem [#allocation8], %s265
          %267 = dma.done %s263, 128
        $region52: #{tpu_custom_call.1} parent=47 // pred_fallthru
          _
      $region48: #{tpu_custom_call.1} parent=5 // pred_fallthru
        _
    $region6: #{tpu_custom_call.1} parent=1 // loop_footer
      %s23 = sadd.s32 1, %s19
    $region7: #{tpu_custom_call.1} parent=1 // loop_footer_branch
      %18 = sbr.rel target = $region3
    $region8: #{tpu_custom_call.1} parent=1 // loop_exit
      _
    %268 = vsyncpa [#allocation4], 1
    %s269 = scalar_lea.sflag [#allocation4], 1
    %270 = vsyncpa %s269, 1
    %271 = vsyncpa [#allocation7], 1
    %s272 = scalar_lea.sflag [#allocation7], 1
    %273 = vsyncpa %s272, 1
    %274 = vsyncpa [#allocation5], 1
    %s275 = scalar_lea.sflag [#allocation5], 1
    %276 = vsyncpa %s275, 1

</llo_original>
